<compile_context>
chip_gen: v7x
topology: tpu7x:2x2x1
jax: 0.10.0
libtpu: 0.0.40
codegen_flags: <defaults>
</compile_context>

<pallas_src>
import functools

import jax
import jax.numpy as jnp
from jax.experimental import pallas as pl
from jax.experimental.pallas import tpu as pltpu


def _round_up(v, m):
    return ((v + m - 1) // m) * m


# ---------------------------------------------------------------------------
# Stage 1: per row block -> A row slab (row softmax, WITHOUT +I) and z rows.
# ---------------------------------------------------------------------------
def _stage1_kernel(n_real, tile_rows, approx_recip,
                   x_ref, wfc_t_ref, bfc_ref, w1_t_ref, b1_ref,
                   w2_t_ref, b2_ref, a_ref, z_ref):
    i = pl.program_id(0)
    row_start = pl.multiple_of(i * tile_rows, tile_rows)

    x_all = x_ref[...]                                   # [Np, Dp]  (compute dtype)
    x_blk = x_ref[pl.ds(row_start, tile_rows), :]        # [TR, Dp]
    cd = x_blk.dtype

    # h = fc(x_blk)   (MXU, f32 accumulation; f32 bias)
    h = jnp.dot(x_blk, wfc_t_ref[...],
                preferred_element_type=jnp.float32) + bfc_ref[...]

    # logits = h @ x.T : contract the feature axis of both operands directly,
    # so no explicit transpose / XLU relayout of x is materialized.
    logits = jax.lax.dot_general(
        h.astype(cd), x_all,
        dimension_numbers=(((1,), (1,)), ((), ())),
        preferred_element_type=jnp.float32)              # [TR, Np]

    # Mask padded key columns (statically skipped when there is no padding).
    n_pad = logits.shape[1]
    if n_pad > n_real:
        col = jax.lax.broadcasted_iota(jnp.int32, logits.shape, 1)
        logits = jnp.where(col < n_real, logits, -1e30)

    # Row softmax in f32; reciprocal on the EUP instead of a VPU divide.
    m = jnp.max(logits, axis=-1, keepdims=True)
    e = jnp.exp(logits - m)
    s = jnp.sum(e, axis=-1, keepdims=True)
    a = e * pl.reciprocal(s, approx=approx_recip)
    a_ref[...] = a.astype(a_ref.dtype)

    # z = Linear2(LeakyReLU_0.1(Linear1(x_blk)))
    # TODO(synk): nn.Dropout() treated as eval-mode identity (training RNG mask not modeled).
    z1 = jnp.dot(x_blk, w1_t_ref[...],
                 preferred_element_type=jnp.float32) + b1_ref[...]
    z1 = jnp.where(z1 > 0, z1, 0.1 * z1)                 # LeakyReLU(0.1), f32 VPU
    z = jnp.dot(z1.astype(cd), w2_t_ref[...],
                preferred_element_type=jnp.float32) + b2_ref[...]
    z_ref[...] = z


# ---------------------------------------------------------------------------
# Stage 2: GPR propagation.  grid = (K, row_blocks); k is the outer sequential
# axis.  A row slabs stream from HBM; y / z / out ([N, P], tiny) stay in VMEM.
# Both axes must be "arbitrary": y_cur / y_new scratch carries state across
# row blocks and across k, so rows cannot be split across TensorCores here.
# ---------------------------------------------------------------------------
def _stage2_kernel(tile_rows, temp_ref, a_ref, z_ref, out_ref,
                   y_cur, y_new, out_acc):
    k = pl.program_id(0)
    rb = pl.program_id(1)
    n_blocks = pl.num_programs(1)
    row_start = pl.multiple_of(rb * tile_rows, tile_rows)
    rows = pl.ds(row_start, tile_rows)

    @pl.when(jnp.logical_and(k == 0, rb == 0))
    def _():
        y_cur[...] = z_ref[...]                          # y_0 = z

    a_blk = a_ref[...]                                   # [TR, Np]
    y_full = y_cur[...].astype(a_blk.dtype)              # [Np, P]

    # A_hat @ y  ==  A @ y + y   (identity folded in; no NxN eye materialized)
    y_rows = jnp.dot(a_blk, y_full,
                     preferred_element_type=jnp.float32) + y_cur[rows, :]
    y_new[rows, :] = y_rows

    @pl.when(k == 0)
    def _():
        out_acc[rows, :] = temp_ref[0] * z_ref[rows, :] + temp_ref[1] * y_rows

    @pl.when(k > 0)
    def _():
        out_acc[rows, :] = out_acc[rows, :] + temp_ref[k + 1] * y_rows

    # End of this k sweep: promote y_new -> y_cur for the next power of A_hat.
    @pl.when(rb == n_blocks - 1)
    def _():
        y_cur[...] = y_new[...]

    out_ref[...] = out_acc[rows, :]                      # last write (k = K-1) wins


# ---------------------------------------------------------------------------
# Wrapper: padding / layout plumbing + the two pallas_calls.
# ---------------------------------------------------------------------------
def gprgnn_forward(x, params, K, *, compute_dtype=jnp.float32, block_rows=256):
    """params = (W_fc, b_fc, W1, b1, W2, b2, temp); returns (out, z, None, None)."""
    w_fc, b_fc, w1, b1, w2, b2, temp = params
    n, din = x.shape
    dm = w1.shape[0]
    p = w2.shape[0]

    f32 = jnp.float32
    cd = jnp.dtype(compute_dtype)
    use_bf16 = bool(cd == jnp.bfloat16)

    # Lane-dense padding: feature dims AND node dim -> multiples of 128.
    din_p = _round_up(din, 128)
    dm_p = _round_up(dm, 128)
    p_p = _round_up(p, 128)

    n128 = _round_up(n, 128)
    tr = min(_round_up(max(block_rows, 128), 128), n128)   # row tile, multiple of 128
    if n128 % tr != 0:
        tr = 128                                           # avoid extra row padding
    n_p = _round_up(n, tr)                                 # multiple of tr and 128
    nb = n_p // tr

    def pad2(a, r, c):
        a = a.astype(f32)
        return jnp.pad(a, ((0, r - a.shape[0]), (0, c - a.shape[1])))

    x_p = pad2(x, n_p, din_p).astype(cd)
    wfc_t = pad2(w_fc.T, din_p, din_p).astype(cd)        # pre-transposed: x @ W^T
    w1_t = pad2(w1.T, din_p, dm_p).astype(cd)
    w2_t = pad2(w2.T, dm_p, p_p).astype(cd)
    bfc_p = jnp.pad(b_fc.astype(f32), (0, din_p - din)).reshape(1, -1)
    b1_p = jnp.pad(b1.astype(f32), (0, dm_p - dm)).reshape(1, -1)
    b2_p = jnp.pad(b2.astype(f32), (0, p_p - p)).reshape(1, -1)

    cdb = int(jnp.dtype(cd).itemsize)

    # Rough VMEM footprint -> adaptive limit, clamped so it is valid on v7x (64 MiB).
    s1_bytes = (n_p * din_p * cdb
                + (din_p * din_p + din_p * dm_p + dm_p * p_p) * cdb
                + (din_p + dm_p + p_p) * 4
                + 2 * tr * n_p * cdb + 2 * tr * p_p * 4
                + 4 * tr * n_p * 4)
    s2_bytes = (2 * tr * n_p * cdb + n_p * p_p * 4
                + 3 * n_p * p_p * 4 + 4 * tr * p_p * 4)
    vmem_limit = int(min(64 * 2 ** 20, max(8 * 2 ** 20, 2 * max(s1_bytes, s2_bytes))))

    # ---- Stage 1: softmax(A) row slabs + z ----------------------------------
    stage1 = pl.pallas_call(
        functools.partial(_stage1_kernel, n, tr, use_bf16),
        out_shape=(
            jax.ShapeDtypeStruct((n_p, n_p), cd),        # A (softmax, no +I)
            jax.ShapeDtypeStruct((n_p, p_p), f32),       # z
        ),
        grid_spec=pltpu.PrefetchScalarGridSpec(
            num_scalar_prefetch=0,
            grid=(nb,),
            in_specs=[
                pl.BlockSpec((n_p, din_p), lambda i: (0, 0)),   # x (full, resident)
                pl.BlockSpec((din_p, din_p), lambda i: (0, 0)),
                pl.BlockSpec((1, din_p), lambda i: (0, 0)),
                pl.BlockSpec((din_p, dm_p), lambda i: (0, 0)),
                pl.BlockSpec((1, dm_p), lambda i: (0, 0)),
                pl.BlockSpec((dm_p, p_p), lambda i: (0, 0)),
                pl.BlockSpec((1, p_p), lambda i: (0, 0)),
            ],
            out_specs=(
                pl.BlockSpec((tr, n_p), lambda i: (i, 0)),
                pl.BlockSpec((tr, p_p), lambda i: (i, 0)),
            ),
        ),
        compiler_params=pltpu.CompilerParams(
            dimension_semantics=("parallel",),           # row blocks split across TCs (v7x)
            vmem_limit_bytes=vmem_limit),
        cost_estimate=pl.CostEstimate(
            flops=int(2 * n_p * din_p * din_p + 2 * n_p * n_p * din_p
                      + 2 * n_p * din_p * dm_p + 2 * n_p * dm_p * p_p),
            transcendentals=int(n_p * n_p),
            bytes_accessed=int(cdb * (n_p * din_p + n_p * n_p) + 4 * n_p * p_p)),
    )
    a_mat, z_pad = stage1(x_p, wfc_t, bfc_p, w1_t, b1_p, w2_t, b2_p)

    # ---- Stage 2: GPR propagation --------------------------------------------
    temp_f32 = temp.astype(f32)
    if K == 0:
        out_pad = temp_f32[0] * z_pad
    else:
        stage2 = pl.pallas_call(
            functools.partial(_stage2_kernel, tr),
            out_shape=jax.ShapeDtypeStruct((n_p, p_p), f32),
            grid_spec=pltpu.PrefetchScalarGridSpec(
                num_scalar_prefetch=0,
                grid=(K, nb),                            # k outer (sequential), rows inner
                in_specs=[
                    pl.BlockSpec(memory_space=pltpu.MemorySpace.SMEM),   # temp coeffs
                    pl.BlockSpec((tr, n_p), lambda k, rb: (rb, 0)),      # A row slab (streamed)
                    pl.BlockSpec((n_p, p_p), lambda k, rb: (0, 0)),      # z (resident)
                ],
                out_specs=pl.BlockSpec((tr, p_p), lambda k, rb: (rb, 0)),
                scratch_shapes=[
                    pltpu.VMEM((n_p, p_p), f32),         # y_cur
                    pltpu.VMEM((n_p, p_p), f32),         # y_new
                    pltpu.VMEM((n_p, p_p), f32),         # out accumulator
                ],
            ),
            compiler_params=pltpu.CompilerParams(
                dimension_semantics=("arbitrary", "arbitrary"),
                vmem_limit_bytes=vmem_limit),
            cost_estimate=pl.CostEstimate(
                flops=int(2 * K * n_p * n_p * p_p),
                transcendentals=0,
                bytes_accessed=int(K * n_p * n_p * cdb + 4 * n_p * p_p * (K + 2))),
        )
        out_pad = stage2(temp_f32, a_mat, z_pad)

    return out_pad[:n, :p], z_pad[:n, :p], None, None


# ---------------------------------------------------------------------------
# Pure-JAX reference and parameter construction (mirror the PyTorch module).
# ---------------------------------------------------------------------------
def ref_forward(x, params, K):
    w_fc, b_fc, w1, b1, w2, b2, temp = params
    hp = jax.lax.Precision.HIGHEST
    h = jnp.dot(x, w_fc.T, precision=hp) + b_fc
    a_hat = jax.nn.softmax(jnp.dot(h, x.T, precision=hp), axis=-1) \
        + jnp.eye(x.shape[0], dtype=x.dtype)
    z1 = jnp.dot(x, w1.T, precision=hp) + b1
    z1 = jnp.where(z1 > 0, z1, 0.1 * z1)
    z = jnp.dot(z1, w2.T, precision=hp) + b2
    out = temp[0] * z
    y = z
    for k in range(K):
        y = jnp.dot(a_hat, y, precision=hp)
        out = out + temp[k + 1] * y
    return out, z


def make_params(key, K, input_dim, d_model, output_dim, alpha=0.1):
    ks = jax.random.split(key, 6)

    def lin(kw, kb, fan_out, fan_in):
        bound = 1.0 / jnp.sqrt(jnp.float32(fan_in))
        w = jax.random.uniform(kw, (fan_out, fan_in), jnp.float32, -bound, bound)
        b = jax.random.uniform(kb, (fan_out,), jnp.float32, -bound, bound)
        return w, b

    w_fc, b_fc = lin(ks[0], ks[1], input_dim, input_dim)
    w1, b1 = lin(ks[2], ks[3], d_model, input_dim)
    w2, b2 = lin(ks[4], ks[5], output_dim, d_model)
    # GPR_prop.reset_parameters(): temp[k] = alpha*(1-alpha)^k, temp[K] = (1-alpha)^K
    temp = jnp.array(
        [alpha * (1.0 - alpha) ** k for k in range(K)] + [(1.0 - alpha) ** K],
        dtype=jnp.float32,
    )
    return (w_fc, b_fc, w1, b1, w2, b2, temp)


if __name__ == "__main__":
    K = 3
    num_nodes, input_dim, d_model, output_dim = 8, 32, 32, 16

    key = jax.random.PRNGKey(0)
    kx, kp = jax.random.split(key)
    x = jax.random.normal(kx, (num_nodes, input_dim), jnp.float32)
    params = make_params(kp, K, input_dim, d_model, output_dim)

    # f32 path: check against the pure-JAX reference.
    out, z, rn_weight, _ = gprgnn_forward(x, params, K)
    out = jax.block_until_ready(out)
    z = jax.block_until_ready(z)
    ref_out, ref_z = ref_forward(x, params, K)
    assert out.shape == ref_out.shape and z.shape == ref_z.shape
    assert jnp.allclose(out, ref_out, rtol=1e-3, atol=1e-3), "out mismatch"
    assert jnp.allclose(z, ref_z, rtol=1e-3, atol=1e-3), "z mismatch"
    assert rn_weight is None

    # bf16 MXU path (v6e/v7x fast path): reduced precision by design, so just
    # exercise the compile path and sanity-check the result.
    out_bf, z_bf, _, _ = gprgnn_forward(x, params, K, compute_dtype=jnp.bfloat16)
    out_bf = jax.block_until_ready(out_bf)
    assert out_bf.shape == ref_out.shape
    assert bool(jnp.all(jnp.isfinite(out_bf)))

    print("KERNEL_OK")
</pallas_src>

<mosaic_0001>
module attributes {stable_mosaic.version = 11 : i64} {
  func.func @_stage1_kernel(%arg0: i32, %arg1: memref<128x128xf32, #tpu.memory_space<vmem>>, %arg2: memref<128x128xf32, #tpu.memory_space<vmem>>, %arg3: memref<1x128xf32, #tpu.memory_space<vmem>>, %arg4: memref<128x128xf32, #tpu.memory_space<vmem>>, %arg5: memref<1x128xf32, #tpu.memory_space<vmem>>, %arg6: memref<128x128xf32, #tpu.memory_space<vmem>>, %arg7: memref<1x128xf32, #tpu.memory_space<vmem>>, %arg8: memref<128x128xf32, #tpu.memory_space<vmem>>, %arg9: memref<128x128xf32, #tpu.memory_space<vmem>>) attributes {dimension_semantics = [#tpu.dimension_semantics<parallel>], iteration_bounds = array<i64: 1>, scalar_prefetch = 0 : i64, scratch_operands = 0 : i64, tpu.core_type = #tpu.core_type<tc>, window_params = [{pipeline_mode = #tpu.pipeline_mode<synchronous>, transform_indices = @transform_0, window_bounds = array<i64: 128, 128>}, {pipeline_mode = #tpu.pipeline_mode<synchronous>, transform_indices = @transform_1, window_bounds = array<i64: 128, 128>}, {pipeline_mode = #tpu.pipeline_mode<synchronous>, transform_indices = @transform_2, window_bounds = array<i64: 1, 128>}, {pipeline_mode = #tpu.pipeline_mode<synchronous>, transform_indices = @transform_3, window_bounds = array<i64: 128, 128>}, {pipeline_mode = #tpu.pipeline_mode<synchronous>, transform_indices = @transform_4, window_bounds = array<i64: 1, 128>}, {pipeline_mode = #tpu.pipeline_mode<synchronous>, transform_indices = @transform_5, window_bounds = array<i64: 128, 128>}, {pipeline_mode = #tpu.pipeline_mode<synchronous>, transform_indices = @transform_6, window_bounds = array<i64: 1, 128>}, {transform_indices = @transform_7, window_bounds = array<i64: 128, 128>}, {transform_indices = @transform_8, window_bounds = array<i64: 128, 128>}]} {
    %c128_i32 = arith.constant 128 : i32
    %0 = arith.muli %arg0, %c128_i32 : i32
    %1 = tpu.assume_multiple %0, 128 : i32
    %c0 = arith.constant 0 : index
    %c0_0 = arith.constant 0 : index
    %2 = vector.load %arg1[%c0, %c0_0] : memref<128x128xf32, #tpu.memory_space<vmem>>, vector<128x128xf32>
    %3 = arith.index_cast %1 : i32 to index
    %c0_1 = arith.constant 0 : index
    %4 = vector.load %arg1[%3, %c0_1] : memref<128x128xf32, #tpu.memory_space<vmem>>, vector<128x128xf32>
    %c0_2 = arith.constant 0 : index
    %c0_3 = arith.constant 0 : index
    %5 = vector.load %arg2[%c0_2, %c0_3] : memref<128x128xf32, #tpu.memory_space<vmem>>, vector<128x128xf32>
    %cst = arith.constant dense<0.000000e+00> : vector<128x128xf32>
    %6 = tpu.matmul %4, %5, %cst {dimension_numbers = #tpu.dot_dimension_numbers<[1], [0], [0], [1], [0, 0, 1, 1], [], []>} : vector<128x128xf32>, vector<128x128xf32>, vector<128x128xf32> -> vector<128x128xf32>
    %c0_4 = arith.constant 0 : index
    %c0_5 = arith.constant 0 : index
    %7 = vector.load %arg3[%c0_4, %c0_5] : memref<1x128xf32, #tpu.memory_space<vmem>>, vector<1x128xf32>
    %8 = vector.broadcast %7 : vector<1x128xf32> to vector<128x128xf32>
    %9 = arith.addf %6, %8 : vector<128x128xf32>
    %cst_6 = arith.constant dense<0.000000e+00> : vector<128x128xf32>
    %10 = tpu.matmul %9, %2, %cst_6 {dimension_numbers = #tpu.dot_dimension_numbers<[1], [1], [0], [0], [0, 0, 1, 0], [], []>} : vector<128x128xf32>, vector<128x128xf32>, vector<128x128xf32> -> vector<128x128xf32>
    %11 = tpu.iota {dimensions = array<i32: 1>} : vector<128x128xi32>
    %c8_i32 = arith.constant 8 : i32
    %12 = vector.broadcast %c8_i32 : i32 to vector<128x128xi32>
    %13 = arith.cmpi slt, %11, %12 : vector<128x128xi32>
    %cst_7 = arith.constant -1.000000e+30 : f32
    %14 = vector.broadcast %cst_7 : f32 to vector<128x128xf32>
    %15 = arith.select %13, %10, %14 : vector<128x128xi1>, vector<128x128xf32>
    %cst_8 = arith.constant dense<0xFF800000> : vector<128xf32>
    %16 = vector.multi_reduction <maximumf>, %15, %cst_8 [1] : vector<128x128xf32> to vector<128xf32>
    %17 = vector.shape_cast %16 : vector<128xf32> to vector<128x1xf32>
    %18 = vector.broadcast %17 : vector<128x1xf32> to vector<128x128xf32>
    %19 = arith.subf %15, %18 : vector<128x128xf32>
    %20 = math.exp %19 : vector<128x128xf32>
    %cst_9 = arith.constant dense<0.000000e+00> : vector<128xf32>
    %21 = vector.multi_reduction <add>, %20, %cst_9 [1] : vector<128x128xf32> to vector<128xf32>
    %22 = vector.shape_cast %21 : vector<128xf32> to vector<128x1xf32>
    %23 = tpu.reciprocal %22 : vector<128x1xf32> -> vector<128x1xf32>
    %24 = vector.broadcast %23 : vector<128x1xf32> to vector<128x128xf32>
    %25 = arith.mulf %20, %24 : vector<128x128xf32>
    %c0_10 = arith.constant 0 : index
    %c0_11 = arith.constant 0 : index
    %26 = vector.load %arg8[%c0_10, %c0_11] : memref<128x128xf32, #tpu.memory_space<vmem>>, vector<128x128xf32>
    tpu.vector_store %arg8[%c0_10, %c0_11], %25 {strides = array<i32>} : memref<128x128xf32, #tpu.memory_space<vmem>>, vector<128x128xf32>,
    %c0_12 = arith.constant 0 : index
    %c0_13 = arith.constant 0 : index
    %27 = vector.load %arg4[%c0_12, %c0_13] : memref<128x128xf32, #tpu.memory_space<vmem>>, vector<128x128xf32>
    %cst_14 = arith.constant dense<0.000000e+00> : vector<128x128xf32>
    %28 = tpu.matmul %4, %27, %cst_14 {dimension_numbers = #tpu.dot_dimension_numbers<[1], [0], [0], [1], [0, 0, 1, 1], [], []>} : vector<128x128xf32>, vector<128x128xf32>, vector<128x128xf32> -> vector<128x128xf32>
    %c0_15 = arith.constant 0 : index
    %c0_16 = arith.constant 0 : index
    %29 = vector.load %arg5[%c0_15, %c0_16] : memref<1x128xf32, #tpu.memory_space<vmem>>, vector<1x128xf32>
    %30 = vector.broadcast %29 : vector<1x128xf32> to vector<128x128xf32>
    %31 = arith.addf %28, %30 : vector<128x128xf32>
    %cst_17 = arith.constant 0.000000e+00 : f32
    %32 = vector.broadcast %cst_17 : f32 to vector<128x128xf32>
    %33 = arith.cmpf ogt, %31, %32 : vector<128x128xf32>
    %cst_18 = arith.constant 1.000000e-01 : f32
    %34 = vector.broadcast %cst_18 : f32 to vector<128x128xf32>
    %35 = arith.mulf %34, %31 : vector<128x128xf32>
    %36 = arith.select %33, %31, %35 : vector<128x128xi1>, vector<128x128xf32>
    %c0_19 = arith.constant 0 : index
    %c0_20 = arith.constant 0 : index
    %37 = vector.load %arg6[%c0_19, %c0_20] : memref<128x128xf32, #tpu.memory_space<vmem>>, vector<128x128xf32>
    %cst_21 = arith.constant dense<0.000000e+00> : vector<128x128xf32>
    %38 = tpu.matmul %36, %37, %cst_21 {dimension_numbers = #tpu.dot_dimension_numbers<[1], [0], [0], [1], [0, 0, 1, 1], [], []>} : vector<128x128xf32>, vector<128x128xf32>, vector<128x128xf32> -> vector<128x128xf32>
    %c0_22 = arith.constant 0 : index
    %c0_23 = arith.constant 0 : index
    %39 = vector.load %arg7[%c0_22, %c0_23] : memref<1x128xf32, #tpu.memory_space<vmem>>, vector<1x128xf32>
    %40 = vector.broadcast %39 : vector<1x128xf32> to vector<128x128xf32>
    %41 = arith.addf %38, %40 : vector<128x128xf32>
    %c0_24 = arith.constant 0 : index
    %c0_25 = arith.constant 0 : index
    %42 = vector.load %arg9[%c0_24, %c0_25] : memref<128x128xf32, #tpu.memory_space<vmem>>, vector<128x128xf32>
    tpu.vector_store %arg9[%c0_24, %c0_25], %41 {strides = array<i32>} : memref<128x128xf32, #tpu.memory_space<vmem>>, vector<128x128xf32>,
    return
  }
  func.func @transform_0(%arg0: i32) -> (i32, i32) {
    %c0_i32 = arith.constant 0 : i32
    %c0_i32_0 = arith.constant 0 : i32
    %c0_i32_1 = arith.constant 0 : i32
    return %c0_i32, %c0_i32_0 : i32, i32
  }
  func.func @transform_1(%arg0: i32) -> (i32, i32) {
    %c0_i32 = arith.constant 0 : i32
    %c0_i32_0 = arith.constant 0 : i32
    %c0_i32_1 = arith.constant 0 : i32
    return %c0_i32, %c0_i32_0 : i32, i32
  }
  func.func @transform_2(%arg0: i32) -> (i32, i32) {
    %c0_i32 = arith.constant 0 : i32
    %c0_i32_0 = arith.constant 0 : i32
    %c0_i32_1 = arith.constant 0 : i32
    return %c0_i32, %c0_i32_0 : i32, i32
  }
  func.func @transform_3(%arg0: i32) -> (i32, i32) {
    %c0_i32 = arith.constant 0 : i32
    %c0_i32_0 = arith.constant 0 : i32
    %c0_i32_1 = arith.constant 0 : i32
    return %c0_i32, %c0_i32_0 : i32, i32
  }
  func.func @transform_4(%arg0: i32) -> (i32, i32) {
    %c0_i32 = arith.constant 0 : i32
    %c0_i32_0 = arith.constant 0 : i32
    %c0_i32_1 = arith.constant 0 : i32
    return %c0_i32, %c0_i32_0 : i32, i32
  }
  func.func @transform_5(%arg0: i32) -> (i32, i32) {
    %c0_i32 = arith.constant 0 : i32
    %c0_i32_0 = arith.constant 0 : i32
    %c0_i32_1 = arith.constant 0 : i32
    return %c0_i32, %c0_i32_0 : i32, i32
  }
  func.func @transform_6(%arg0: i32) -> (i32, i32) {
    %c0_i32 = arith.constant 0 : i32
    %c0_i32_0 = arith.constant 0 : i32
    %c0_i32_1 = arith.constant 0 : i32
    return %c0_i32, %c0_i32_0 : i32, i32
  }
  func.func @transform_7(%arg0: i32) -> (i32, i32) {
    %c0_i32 = arith.constant 0 : i32
    %c0_i32_0 = arith.constant 0 : i32
    return %arg0, %c0_i32 : i32, i32
  }
  func.func @transform_8(%arg0: i32) -> (i32, i32) {
    %c0_i32 = arith.constant 0 : i32
    %c0_i32_0 = arith.constant 0 : i32
    return %arg0, %c0_i32 : i32, i32
  }
}

</mosaic_0001>

<llo_original>
// kernel: tpu_custom_call.1
$region0: #{tpu_custom_call.1}
  #allocation0 [shape = 'u32[]', space=smem, size = 0x4, offset = 0x4, fixed_abs, tag = 'smem constant byte address 0x4 - core index']
  #allocation1 [shape = 'u32[144,128]{1,0:T(1,128)}', space=vmem, size = 0x12000, scoped, tag = 'internal scratch']
  %s0 = inlined_call_operand.hbm [shape: f32[128,128], index: 0, kind: input, shape index: {}]
  %s1 = inlined_call_operand.hbm [shape: f32[128,128], index: 1, kind: input, shape index: {}]
  %s2 = inlined_call_operand.vmem [shape: f32[1,128], index: 2, kind: input, shape index: {}]
  %s3 = inlined_call_operand.hbm [shape: f32[128,128], index: 3, kind: input, shape index: {}]
  %s4 = inlined_call_operand.vmem [shape: f32[1,128], index: 4, kind: input, shape index: {}]
  %s5 = inlined_call_operand.hbm [shape: f32[128,128], index: 5, kind: input, shape index: {}]
  %s6 = inlined_call_operand.vmem [shape: f32[1,128], index: 6, kind: input, shape index: {}]
  %s7 = inlined_call_operand.hbm [shape: f32[128,128], index: 7, kind: output, shape index: {0}]
  %s8 = inlined_call_operand.hbm [shape: f32[128,128], index: 8, kind: output, shape index: {1}]
  %9 = xla_tuple %s7, %s8
  %s10 = sld [smem:[#allocation0]]
  $region62: #{tpu_custom_call.1} parent=0
    _
  %s12 = ssub.s32 1, %s10
  %s13 = scalar_select 0, %s12, %s10
  $region1: #{tpu_custom_call.1} parent=0
    #allocation2 [shape = 'u8[65536]{0}', space=vmem, size = 0x10000, scoped, tag = 'input window, operand 0, single buffered']
    #allocation3 [shape = 's32[1]{0}', space=sflag, size = 0x4, scoped, tag = 'scoped memory for tpu_custom_call.1']
    #allocation4 [shape = 's32[1]{0}', space=sflag, size = 0x4, scoped, tag = 'scoped memory for tpu_custom_call.1']
    #allocation5 [shape = 'u8[65536]{0}', space=vmem, size = 0x10000, scoped, tag = 'input window, operand 1, single buffered']
    #allocation6 [shape = 's32[1]{0}', space=sflag, size = 0x4, scoped, tag = 'scoped memory for tpu_custom_call.1']
    #allocation7 [shape = 'u8[65536]{0}', space=vmem, size = 0x10000, scoped, tag = 'input window, operand 3, single buffered']
    #allocation8 [shape = 'u8[65536]{0}', space=vmem, size = 0x10000, scoped, tag = 'input window, operand 5, single buffered']
    #allocation9 [shape = 's32[1]{0}', space=sflag, size = 0x4, scoped, tag = 'scoped memory for tpu_custom_call.1']
    #allocation10 [shape = 'u8[65536]{0}', space=vmem, size = 0x10000, scoped, tag = 'output window, operand 0, single buffered']
    #allocation11 [shape = 'u8[65536]{0}', space=vmem, size = 0x10000, scoped, tag = 'output window, operand 1, single buffered']
    #allocation12 [shape = 's32[1]{0}', space=sflag, size = 0x4, scoped, tag = 'scoped memory for tpu_custom_call.1']
    %14 = vsyncpa [#allocation3], 0
    %15 = vsyncpa [#allocation6], 0
    %16 = vsyncpa [#allocation9], 0
    %17 = vsyncpa [#allocation4], 0
    %18 = vsyncpa [#allocation12], 0
    // Predicated region
    $region2: #{tpu_custom_call.1} parent=1 // pred_check
      _
    $region3: #{tpu_custom_call.1} parent=1 // pred_check_branch
      %20 = sbr.rel (0) target = $region5
    $region4: #{tpu_custom_call.1} parent=1 // pred_region
      %s22 = ssub.s32 2048, 2048
      %23 = vsyncadd [#allocation3], %s22
      %s24 = sshll.u32 [#allocation2], 4
      %s25 = int_to_ptr.vmem [resolvable:$true] %s24
      %30 = dma.hbm_to_vmem [thread:$0]  %s0, 2048, %s25, [#allocation3], 128, 128, 8
    $region5: #{tpu_custom_call.1} parent=1 // pred_fallthru
      _
    // Predicated region
    $region6: #{tpu_custom_call.1} parent=1 // pred_check
      _
    $region7: #{tpu_custom_call.1} parent=1 // pred_check_branch
      %32 = sbr.rel (0) target = $region9
    $region8: #{tpu_custom_call.1} parent=1 // pred_region
      %s34 = ssub.s32 2048, 2048
      %35 = vsyncadd [#allocation6], %s34
      %s36 = sshll.u32 [#allocation5], 4
      %s37 = int_to_ptr.vmem [resolvable:$true] %s36
      %42 = dma.hbm_to_vmem [thread:$0]  %s1, 2048, %s37, [#allocation6], 128, 128, 8
    $region9: #{tpu_custom_call.1} parent=1 // pred_fallthru
      _
    // Predicated region
    $region10: #{tpu_custom_call.1} parent=1 // pred_check
      _
    $region11: #{tpu_custom_call.1} parent=1 // pred_check_branch
      %44 = sbr.rel (0) target = $region13
    $region12: #{tpu_custom_call.1} parent=1 // pred_region
      _
    $region13: #{tpu_custom_call.1} parent=1 // pred_fallthru
      _
    // Predicated region
    $region14: #{tpu_custom_call.1} parent=1 // pred_check
      _
    $region15: #{tpu_custom_call.1} parent=1 // pred_check_branch
      %46 = sbr.rel (0) target = $region17
    $region16: #{tpu_custom_call.1} parent=1 // pred_region
      %s48 = ssub.s32 2048, 2048
      %49 = vsyncadd [#allocation6], %s48
      %s50 = sshll.u32 [#allocation7], 4
      %s51 = int_to_ptr.vmem [resolvable:$true] %s50
      %56 = dma.hbm_to_vmem [thread:$0]  %s3, 2048, %s51, [#allocation6], 128, 128, 8
    $region17: #{tpu_custom_call.1} parent=1 // pred_fallthru
      _
    // Predicated region
    $region18: #{tpu_custom_call.1} parent=1 // pred_check
      _
    $region19: #{tpu_custom_call.1} parent=1 // pred_check_branch
      %58 = sbr.rel (0) target = $region21
    $region20: #{tpu_custom_call.1} parent=1 // pred_region
      _
    $region21: #{tpu_custom_call.1} parent=1 // pred_fallthru
      _
    // Predicated region
    $region22: #{tpu_custom_call.1} parent=1 // pred_check
      _
    $region23: #{tpu_custom_call.1} parent=1 // pred_check_branch
      %60 = sbr.rel (0) target = $region25
    $region24: #{tpu_custom_call.1} parent=1 // pred_region
      %s62 = ssub.s32 2048, 2048
      %63 = vsyncadd [#allocation9], %s62
      %s64 = sshll.u32 [#allocation8], 4
      %s65 = int_to_ptr.vmem [resolvable:$true] %s64
      %70 = dma.hbm_to_vmem [thread:$0]  %s5, 2048, %s65, [#allocation9], 128, 128, 8
    $region25: #{tpu_custom_call.1} parent=1 // pred_fallthru
      _
    // Predicated region
    $region26: #{tpu_custom_call.1} parent=1 // pred_check
      _
    $region27: #{tpu_custom_call.1} parent=1 // pred_check_branch
      %72 = sbr.rel (0) target = $region29
    $region28: #{tpu_custom_call.1} parent=1 // pred_region
      _
    $region29: #{tpu_custom_call.1} parent=1 // pred_fallthru
      _
    // Predicated region
    $region30: #{tpu_custom_call.1} parent=1 // pred_check
      _
    $region31: #{tpu_custom_call.1} parent=1 // pred_check_branch
      %74 = sbr.rel (0) target = $region33
    $region32: #{tpu_custom_call.1} parent=1 // pred_region
      %75 = dma.done [#allocation3], 2048
    $region33: #{tpu_custom_call.1} parent=1 // pred_fallthru
      _
    // Predicated region
    $region34: #{tpu_custom_call.1} parent=1 // pred_check
      _
    $region35: #{tpu_custom_call.1} parent=1 // pred_check_branch
      %77 = sbr.rel (0) target = $region37
    $region36: #{tpu_custom_call.1} parent=1 // pred_region
      %78 = dma.done [#allocation6], 2048
    $region37: #{tpu_custom_call.1} parent=1 // pred_fallthru
      _
    // Predicated region
    $region38: #{tpu_custom_call.1} parent=1 // pred_check
      _
    $region39: #{tpu_custom_call.1} parent=1 // pred_check_branch
      %80 = sbr.rel (0) target = $region41
    $region40: #{tpu_custom_call.1} parent=1 // pred_region
      %81 = dma.done [#allocation6], 2048
    $region41: #{tpu_custom_call.1} parent=1 // pred_fallthru
      _
    // Predicated region
    $region42: #{tpu_custom_call.1} parent=1 // pred_check
      _
    $region43: #{tpu_custom_call.1} parent=1 // pred_check_branch
      %83 = sbr.rel (0) target = $region45
    $region44: #{tpu_custom_call.1} parent=1 // pred_region
      %84 = dma.done [#allocation9], 2048
    $region45: #{tpu_custom_call.1} parent=1 // pred_fallthru
      _
    %s85 = smul.u32 0, 128
    %v86 = vld [vmem:[#allocation2] sm:$0xff]
    %v87 = vld [vmem:[#allocation2 + $0x8] sm:$0xff]
    %v88 = vld [vmem:[#allocation2 + $0x10] sm:$0xff]
    %v89 = vld [vmem:[#allocation2 + $0x18] sm:$0xff]
    %v90 = vld [vmem:[#allocation2 + $0x20] sm:$0xff]
    %v91 = vld [vmem:[#allocation2 + $0x28] sm:$0xff]
    %v92 = vld [vmem:[#allocation2 + $0x30] sm:$0xff]
    %v93 = vld [vmem:[#allocation2 + $0x38] sm:$0xff]
    %v94 = vld [vmem:[#allocation2 + $0x40] sm:$0xff]
    %v95 = vld [vmem:[#allocation2 + $0x48] sm:$0xff]
    %v96 = vld [vmem:[#allocation2 + $0x50] sm:$0xff]
    %v97 = vld [vmem:[#allocation2 + $0x58] sm:$0xff]
    %v98 = vld [vmem:[#allocation2 + $0x60] sm:$0xff]
    %v99 = vld [vmem:[#allocation2 + $0x68] sm:$0xff]
    %v100 = vld [vmem:[#allocation2 + $0x70] sm:$0xff]
    %v101 = vld [vmem:[#allocation2 + $0x78] sm:$0xff]
    %s102 = scalar_lea.vmem [#allocation2], %s85
    %v103 = vld [vmem:[%s102] sm:$0xff]
    %v104 = vld [vmem:[%s102 + $0x8] sm:$0xff]
    %v105 = vld [vmem:[%s102 + $0x10] sm:$0xff]
    %v106 = vld [vmem:[%s102 + $0x18] sm:$0xff]
    %v107 = vld [vmem:[%s102 + $0x20] sm:$0xff]
    %v108 = vld [vmem:[%s102 + $0x28] sm:$0xff]
    %v109 = vld [vmem:[%s102 + $0x30] sm:$0xff]
    %v110 = vld [vmem:[%s102 + $0x38] sm:$0xff]
    %v111 = vld [vmem:[%s102 + $0x40] sm:$0xff]
    %v112 = vld [vmem:[%s102 + $0x48] sm:$0xff]
    %v113 = vld [vmem:[%s102 + $0x50] sm:$0xff]
    %v114 = vld [vmem:[%s102 + $0x58] sm:$0xff]
    %v115 = vld [vmem:[%s102 + $0x60] sm:$0xff]
    %v116 = vld [vmem:[%s102 + $0x68] sm:$0xff]
    %v117 = vld [vmem:[%s102 + $0x70] sm:$0xff]
    %v118 = vld [vmem:[%s102 + $0x78] sm:$0xff]
    %v119 = vld [vmem:[#allocation5] sm:$0xff]
    %v120 = vld [vmem:[#allocation5 + $0x8] sm:$0xff]
    %v121 = vld [vmem:[#allocation5 + $0x10] sm:$0xff]
    %v122 = vld [vmem:[#allocation5 + $0x18] sm:$0xff]
    %v123 = vld [vmem:[#allocation5 + $0x20] sm:$0xff]
    %v124 = vld [vmem:[#allocation5 + $0x28] sm:$0xff]
    %v125 = vld [vmem:[#allocation5 + $0x30] sm:$0xff]
    %v126 = vld [vmem:[#allocation5 + $0x38] sm:$0xff]
    %v127 = vld [vmem:[#allocation5 + $0x40] sm:$0xff]
    %v128 = vld [vmem:[#allocation5 + $0x48] sm:$0xff]
    %v129 = vld [vmem:[#allocation5 + $0x50] sm:$0xff]
    %v130 = vld [vmem:[#allocation5 + $0x58] sm:$0xff]
    %v131 = vld [vmem:[#allocation5 + $0x60] sm:$0xff]
    %v132 = vld [vmem:[#allocation5 + $0x68] sm:$0xff]
    %v133 = vld [vmem:[#allocation5 + $0x70] sm:$0xff]
    %v134 = vld [vmem:[#allocation5 + $0x78] sm:$0xff]
    %v135 = vld [vmem:[%s2] sm:$0x1]
    %v137 = vlaneseq
    %v138 = vshrl.u32 %v137, 7
    %v139 = vsub.s32 0, %v138
    %v140 = vrot.slane %v135, %v139
    %142 = vmatprep.subr.mxu0 0.0
    %143 = vmatpush1.msra.mxu0 %v119
    %144 = vmatprep.subr.mxu0 0.0
    %145 = vmatpush1.msra.mxu0 %v120
    %146 = vmatprep.subr.mxu0 0.0
    %147 = vmatpush1.msra.mxu0 %v121
    %148 = vmatprep.subr.mxu0 0.0
    %149 = vmatpush1.msra.mxu0 %v122
    %150 = vmatprep.subr.mxu0 0.0
    %151 = vmatpush1.msra.mxu0 %v123
    %152 = vmatprep.subr.mxu0 0.0
    %153 = vmatpush1.msra.mxu0 %v124
    %154 = vmatprep.subr.mxu0 0.0
    %155 = vmatpush1.msra.mxu0 %v125
    %156 = vmatprep.subr.mxu0 0.0
    %157 = vmatpush1.msra.mxu0 %v126
    %158 = vmatprep.subr.mxu0 0.0
    %159 = vmatpush1.msra.mxu0 %v127
    %160 = vmatprep.subr.mxu0 0.0
    %161 = vmatpush1.msra.mxu0 %v128
    %162 = vmatprep.subr.mxu0 0.0
    %163 = vmatpush1.msra.mxu0 %v129
    %164 = vmatprep.subr.mxu0 0.0
    %165 = vmatpush1.msra.mxu0 %v130
    %166 = vmatprep.subr.mxu0 0.0
    %167 = vmatpush1.msra.mxu0 %v131
    %168 = vmatprep.subr.mxu0 0.0
    %169 = vmatpush1.msra.mxu0 %v132
    %170 = vmatprep.subr.mxu0 0.0
    %171 = vmatpush1.msra.mxu0 %v133
    %172 = vmatprep.subr.mxu0 0.0
    %173 = vmatpush1.msra.mxu0 %v134
    %174 = vmatprep.subr.mxu0 0.0
    %175 = vmatpush1.msra.mxu0 0.0
    %176 = vmatprep.subr.mxu0 0.0
    %177 = vmatpush1.msra.mxu0 0.0
    %178 = vmatprep.subr.mxu0 0.0
    %179 = vmatpush1.msra.mxu0 0.0
    %180 = vmatprep.subr.mxu0 0.0
    %181 = vmatpush1.msra.mxu0 0.0
    %182 = vmatprep.subr.mxu0 0.0
    %183 = vmatpush1.msra.mxu0 0.0
    %184 = vmatprep.subr.mxu0 0.0
    %185 = vmatpush1.msra.mxu0 0.0
    %186 = vmatprep.subr.mxu0 0.0
    %187 = vmatpush1.msra.mxu0 0.0
    %188 = vmatprep.subr.mxu0 0.0
    %189 = vmatpush1.msra.mxu0 0.0
    %190 = vmatprep.subr.mxu0 0.0
    %191 = vmatpush1.msra.mxu0 0.0
    %192 = vmatprep.subr.mxu0 0.0
    %193 = vmatpush1.msra.mxu0 0.0
    %194 = vmatprep.subr.mxu0 0.0
    %195 = vmatpush1.msra.mxu0 0.0
    %196 = vmatprep.subr.mxu0 0.0
    %197 = vmatpush1.msra.mxu0 0.0
    %198 = vmatprep.subr.mxu0 0.0
    %199 = vmatpush1.msra.mxu0 0.0
    %200 = vmatprep.subr.mxu0 0.0
    %201 = vmatpush1.msra.mxu0 0.0
    %202 = vmatprep.subr.mxu0 0.0
    %203 = vmatpush1.msra.mxu0 0.0
    %204 = vmatprep.subr.mxu0 0.0
    %205 = vmatpush1.msra.mxu0 0.0
    %206 = vmatprep.mubr.f32.mxu0 0.0
    %207 = vmatmul.mubr.f32.gmra.mrb[0].mxu0 %v103
    %v208 = vpop.f32.mrb[0].mxu0
    %v209 = vadd.f32 %v140, %v208
    %v210 = vpop.f32.mrb[0].mxu0
    %211 = vmatprep.mubr.f32.mxu0 0.0
    %212 = vmatmul.mubr.f32.gmra.mrb[0].mxu0 %v104
    %v213 = vpop.f32.mrb[0].mxu0
    %v214 = vadd.f32 %v140, %v213
    %v215 = vpop.f32.mrb[0].mxu0
    %216 = vmatprep.mubr.f32.mxu0 0.0
    %217 = vmatmul.mubr.f32.gmra.mrb[0].mxu0 %v105
    %v218 = vpop.f32.mrb[0].mxu0
    %v219 = vadd.f32 %v140, %v218
    %v220 = vpop.f32.mrb[0].mxu0
    %221 = vmatprep.mubr.f32.mxu0 0.0
    %222 = vmatmul.mubr.f32.gmra.mrb[0].mxu0 %v106
    %v223 = vpop.f32.mrb[0].mxu0
    %v224 = vadd.f32 %v140, %v223
    %v225 = vpop.f32.mrb[0].mxu0
    %226 = vmatprep.mubr.f32.mxu0 0.0
    %227 = vmatmul.mubr.f32.gmra.mrb[0].mxu0 %v107
    %v228 = vpop.f32.mrb[0].mxu0
    %v229 = vadd.f32 %v140, %v228
    %v230 = vpop.f32.mrb[0].mxu0
    %231 = vmatprep.mubr.f32.mxu0 0.0
    %232 = vmatmul.mubr.f32.gmra.mrb[0].mxu0 %v108
    %v233 = vpop.f32.mrb[0].mxu0
    %v234 = vadd.f32 %v140, %v233
    %v235 = vpop.f32.mrb[0].mxu0
    %236 = vmatprep.mubr.f32.mxu0 0.0
    %237 = vmatmul.mubr.f32.gmra.mrb[0].mxu0 %v109
    %v238 = vpop.f32.mrb[0].mxu0
    %v239 = vadd.f32 %v140, %v238
    %v240 = vpop.f32.mrb[0].mxu0
    %241 = vmatprep.mubr.f32.mxu0 0.0
    %242 = vmatmul.mubr.f32.gmra.mrb[0].mxu0 %v110
    %v243 = vpop.f32.mrb[0].mxu0
    %v244 = vadd.f32 %v140, %v243
    %v245 = vpop.f32.mrb[0].mxu0
    %246 = vmatprep.mubr.f32.mxu0 0.0
    %247 = vmatmul.mubr.f32.gmra.mrb[0].mxu0 %v111
    %v248 = vpop.f32.mrb[0].mxu0
    %v249 = vadd.f32 %v140, %v248
    %v250 = vpop.f32.mrb[0].mxu0
    %251 = vmatprep.mubr.f32.mxu0 0.0
    %252 = vmatmul.mubr.f32.gmra.mrb[0].mxu0 %v112
    %v253 = vpop.f32.mrb[0].mxu0
    %v254 = vadd.f32 %v140, %v253
    %v255 = vpop.f32.mrb[0].mxu0
    %256 = vmatprep.mubr.f32.mxu0 0.0
    %257 = vmatmul.mubr.f32.gmra.mrb[0].mxu0 %v113
    %v258 = vpop.f32.mrb[0].mxu0
    %v259 = vadd.f32 %v140, %v258
    %v260 = vpop.f32.mrb[0].mxu0
    %261 = vmatprep.mubr.f32.mxu0 0.0
    %262 = vmatmul.mubr.f32.gmra.mrb[0].mxu0 %v114
    %v263 = vpop.f32.mrb[0].mxu0
    %v264 = vadd.f32 %v140, %v263
    %v265 = vpop.f32.mrb[0].mxu0
    %266 = vmatprep.mubr.f32.mxu0 0.0
    %267 = vmatmul.mubr.f32.gmra.mrb[0].mxu0 %v115
    %v268 = vpop.f32.mrb[0].mxu0
    %v269 = vadd.f32 %v140, %v268
    %v270 = vpop.f32.mrb[0].mxu0
    %271 = vmatprep.mubr.f32.mxu0 0.0
    %272 = vmatmul.mubr.f32.gmra.mrb[0].mxu0 %v116
    %v273 = vpop.f32.mrb[0].mxu0
    %v274 = vadd.f32 %v140, %v273
    %v275 = vpop.f32.mrb[0].mxu0
    %276 = vmatprep.mubr.f32.mxu0 0.0
    %277 = vmatmul.mubr.f32.gmra.mrb[0].mxu0 %v117
    %v278 = vpop.f32.mrb[0].mxu0
    %v279 = vadd.f32 %v140, %v278
    %v280 = vpop.f32.mrb[0].mxu0
    %281 = vmatprep.mubr.f32.mxu0 0.0
    %282 = vmatmul.mubr.f32.gmra.mrb[0].mxu0 %v118
    %v283 = vpop.f32.mrb[0].mxu0
    %v284 = vadd.f32 %v140, %v283
    %v285 = vpop.f32.mrb[0].mxu0
    %286 = vdwg.mxu0
    %287 = vmatprep.subr.mxu0 0.0
    %288 = vmatpush1.xpose.msra.mxu0 %v86
    %289 = vmatprep.subr.mxu0 0.0
    %290 = vmatpush1.xpose.msra.mxu0 %v87
    %291 = vmatprep.subr.mxu0 0.0
    %292 = vmatpush1.xpose.msra.mxu0 %v88
    %293 = vmatprep.subr.mxu0 0.0
    %294 = vmatpush1.xpose.msra.mxu0 %v89
    %295 = vmatprep.subr.mxu0 0.0
    %296 = vmatpush1.xpose.msra.mxu0 %v90
    %297 = vmatprep.subr.mxu0 0.0
    %298 = vmatpush1.xpose.msra.mxu0 %v91
    %299 = vmatprep.subr.mxu0 0.0
    %300 = vmatpush1.xpose.msra.mxu0 %v92
    %301 = vmatprep.subr.mxu0 0.0
    %302 = vmatpush1.xpose.msra.mxu0 %v93
    %303 = vmatprep.subr.mxu0 0.0
    %304 = vmatpush1.xpose.msra.mxu0 %v94
    %305 = vmatprep.subr.mxu0 0.0
    %306 = vmatpush1.xpose.msra.mxu0 %v95
    %307 = vmatprep.subr.mxu0 0.0
    %308 = vmatpush1.xpose.msra.mxu0 %v96
    %309 = vmatprep.subr.mxu0 0.0
    %310 = vmatpush1.xpose.msra.mxu0 %v97
    %311 = vmatprep.subr.mxu0 0.0
    %312 = vmatpush1.xpose.msra.mxu0 %v98
    %313 = vmatprep.subr.mxu0 0.0
    %314 = vmatpush1.xpose.msra.mxu0 %v99
    %315 = vmatprep.subr.mxu0 0.0
    %316 = vmatpush1.xpose.msra.mxu0 %v100
    %317 = vmatprep.subr.mxu0 0.0
    %318 = vmatpush1.xpose.msra.mxu0 %v101
    %319 = vmatprep.subr.mxu0 0.0
    %320 = vmatpush1.xpose.msra.mxu0 0.0
    %321 = vmatprep.subr.mxu0 0.0
    %322 = vmatpush1.xpose.msra.mxu0 0.0
    %323 = vmatprep.subr.mxu0 0.0
    %324 = vmatpush1.xpose.msra.mxu0 0.0
    %325 = vmatprep.subr.mxu0 0.0
    %326 = vmatpush1.xpose.msra.mxu0 0.0
    %327 = vmatprep.subr.mxu0 0.0
    %328 = vmatpush1.xpose.msra.mxu0 0.0
    %329 = vmatprep.subr.mxu0 0.0
    %330 = vmatpush1.xpose.msra.mxu0 0.0
    %331 = vmatprep.subr.mxu0 0.0
    %332 = vmatpush1.xpose.msra.mxu0 0.0
    %333 = vmatprep.subr.mxu0 0.0
    %334 = vmatpush1.xpose.msra.mxu0 0.0
    %335 = vmatprep.subr.mxu0 0.0
    %336 = vmatpush1.xpose.msra.mxu0 0.0
    %337 = vmatprep.subr.mxu0 0.0
    %338 = vmatpush1.xpose.msra.mxu0 0.0
    %339 = vmatprep.subr.mxu0 0.0
    %340 = vmatpush1.xpose.msra.mxu0 0.0
    %341 = vmatprep.subr.mxu0 0.0
    %342 = vmatpush1.xpose.msra.mxu0 0.0
    %343 = vmatprep.subr.mxu0 0.0
    %344 = vmatpush1.xpose.msra.mxu0 0.0
    %345 = vmatprep.subr.mxu0 0.0
    %346 = vmatpush1.xpose.msra.mxu0 0.0
    %347 = vmatprep.subr.mxu0 0.0
    %348 = vmatpush1.xpose.msra.mxu0 0.0
    %349 = vmatprep.subr.mxu0 0.0
    %350 = vmatpush1.xpose.msra.mxu0 0.0
    %351 = vmatprep.mubr.f32.mxu0 0.0
    %352 = vmatmul.mubr.f32.gmra.mrb[0].mxu0 %v209
    %v353 = vpop.f32.mrb[0].mxu0
    %v354 = vadd.f32 0.0, %v353
    %v355 = vpop.f32.mrb[0].mxu0
    %356 = vmatprep.mubr.f32.mxu0 0.0
    %357 = vmatmul.mubr.f32.gmra.mrb[0].mxu0 %v214
    %v358 = vpop.f32.mrb[0].mxu0
    %v359 = vadd.f32 0.0, %v358
    %v360 = vpop.f32.mrb[0].mxu0
    %361 = vmatprep.mubr.f32.mxu0 0.0
    %362 = vmatmul.mubr.f32.gmra.mrb[0].mxu0 %v219
    %v363 = vpop.f32.mrb[0].mxu0
    %v364 = vadd.f32 0.0, %v363
    %v365 = vpop.f32.mrb[0].mxu0
    %366 = vmatprep.mubr.f32.mxu0 0.0
    %367 = vmatmul.mubr.f32.gmra.mrb[0].mxu0 %v224
    %v368 = vpop.f32.mrb[0].mxu0
    %v369 = vadd.f32 0.0, %v368
    %v370 = vpop.f32.mrb[0].mxu0
    %371 = vmatprep.mubr.f32.mxu0 0.0
    %372 = vmatmul.mubr.f32.gmra.mrb[0].mxu0 %v229
    %v373 = vpop.f32.mrb[0].mxu0
    %v374 = vadd.f32 0.0, %v373
    %v375 = vpop.f32.mrb[0].mxu0
    %376 = vmatprep.mubr.f32.mxu0 0.0
    %377 = vmatmul.mubr.f32.gmra.mrb[0].mxu0 %v234
    %v378 = vpop.f32.mrb[0].mxu0
    %v379 = vadd.f32 0.0, %v378
    %v380 = vpop.f32.mrb[0].mxu0
    %381 = vmatprep.mubr.f32.mxu0 0.0
    %382 = vmatmul.mubr.f32.gmra.mrb[0].mxu0 %v239
    %v383 = vpop.f32.mrb[0].mxu0
    %v384 = vadd.f32 0.0, %v383
    %v385 = vpop.f32.mrb[0].mxu0
    %386 = vmatprep.mubr.f32.mxu0 0.0
    %387 = vmatmul.mubr.f32.gmra.mrb[0].mxu0 %v244
    %v388 = vpop.f32.mrb[0].mxu0
    %v389 = vadd.f32 0.0, %v388
    %v390 = vpop.f32.mrb[0].mxu0
    %391 = vmatprep.mubr.f32.mxu0 0.0
    %392 = vmatmul.mubr.f32.gmra.mrb[0].mxu0 %v249
    %v393 = vpop.f32.mrb[0].mxu0
    %v394 = vadd.f32 0.0, %v393
    %v395 = vpop.f32.mrb[0].mxu0
    %396 = vmatprep.mubr.f32.mxu0 0.0
    %397 = vmatmul.mubr.f32.gmra.mrb[0].mxu0 %v254
    %v398 = vpop.f32.mrb[0].mxu0
    %v399 = vadd.f32 0.0, %v398
    %v400 = vpop.f32.mrb[0].mxu0
    %401 = vmatprep.mubr.f32.mxu0 0.0
    %402 = vmatmul.mubr.f32.gmra.mrb[0].mxu0 %v259
    %v403 = vpop.f32.mrb[0].mxu0
    %v404 = vadd.f32 0.0, %v403
    %v405 = vpop.f32.mrb[0].mxu0
    %406 = vmatprep.mubr.f32.mxu0 0.0
    %407 = vmatmul.mubr.f32.gmra.mrb[0].mxu0 %v264
    %v408 = vpop.f32.mrb[0].mxu0
    %v409 = vadd.f32 0.0, %v408
    %v410 = vpop.f32.mrb[0].mxu0
    %411 = vmatprep.mubr.f32.mxu0 0.0
    %412 = vmatmul.mubr.f32.gmra.mrb[0].mxu0 %v269
    %v413 = vpop.f32.mrb[0].mxu0
    %v414 = vadd.f32 0.0, %v413
    %v415 = vpop.f32.mrb[0].mxu0
    %416 = vmatprep.mubr.f32.mxu0 0.0
    %417 = vmatmul.mubr.f32.gmra.mrb[0].mxu0 %v274
    %v418 = vpop.f32.mrb[0].mxu0
    %v419 = vadd.f32 0.0, %v418
    %v420 = vpop.f32.mrb[0].mxu0
    %421 = vmatprep.mubr.f32.mxu0 0.0
    %422 = vmatmul.mubr.f32.gmra.mrb[0].mxu0 %v279
    %v423 = vpop.f32.mrb[0].mxu0
    %v424 = vadd.f32 0.0, %v423
    %v425 = vpop.f32.mrb[0].mxu0
    %426 = vmatprep.mubr.f32.mxu0 0.0
    %427 = vmatmul.mubr.f32.gmra.mrb[0].mxu0 %v284
    %v428 = vpop.f32.mrb[0].mxu0
    %v429 = vadd.f32 0.0, %v428
    %v430 = vpop.f32.mrb[0].mxu0
    %431 = vdwg.mxu0
    %v432 = vlaneseq
    %v433 = vand.u32 %v432, 127
    %vm434 = vcmp.lt.s32.totalorder %v433, 8
    %v435 = vsel %vm434, %v354, -1e+30
    %v436 = vsel %vm434, %v359, -1e+30
    %v437 = vsel %vm434, %v364, -1e+30
    %v438 = vsel %vm434, %v369, -1e+30
    %v439 = vsel %vm434, %v374, -1e+30
    %v440 = vsel %vm434, %v379, -1e+30
    %v441 = vsel %vm434, %v384, -1e+30
    %v442 = vsel %vm434, %v389, -1e+30
    %v443 = vsel %vm434, %v394, -1e+30
    %v444 = vsel %vm434, %v399, -1e+30
    %v445 = vsel %vm434, %v404, -1e+30
    %v446 = vsel %vm434, %v409, -1e+30
    %v447 = vsel %vm434, %v414, -1e+30
    %v448 = vsel %vm434, %v419, -1e+30
    %v449 = vsel %vm434, %v424, -1e+30
    %v450 = vsel %vm434, %v429, -1e+30
    %451 = vmax.xlane.f32.xlu0 %v435
    %v452 = vpop.xlane.xlu0 %451
    %453 = vmax.xlane.f32.xlu0 %v436
    %v454 = vpop.xlane.xlu0 %453
    %455 = vmax.xlane.f32.xlu0 %v437
    %v456 = vpop.xlane.xlu0 %455
    %457 = vmax.xlane.f32.xlu0 %v438
    %v458 = vpop.xlane.xlu0 %457
    %459 = vmax.xlane.f32.xlu0 %v439
    %v460 = vpop.xlane.xlu0 %459
    %461 = vmax.xlane.f32.xlu0 %v440
    %v462 = vpop.xlane.xlu0 %461
    %463 = vmax.xlane.f32.xlu0 %v441
    %v464 = vpop.xlane.xlu0 %463
    %465 = vmax.xlane.f32.xlu0 %v442
    %v466 = vpop.xlane.xlu0 %465
    %467 = vmax.xlane.f32.xlu0 %v443
    %v468 = vpop.xlane.xlu0 %467
    %469 = vmax.xlane.f32.xlu0 %v444
    %v470 = vpop.xlane.xlu0 %469
    %471 = vmax.xlane.f32.xlu0 %v445
    %v472 = vpop.xlane.xlu0 %471
    %473 = vmax.xlane.f32.xlu0 %v446
    %v474 = vpop.xlane.xlu0 %473
    %475 = vmax.xlane.f32.xlu0 %v447
    %v476 = vpop.xlane.xlu0 %475
    %477 = vmax.xlane.f32.xlu0 %v448
    %v478 = vpop.xlane.xlu0 %477
    %479 = vmax.xlane.f32.xlu0 %v449
    %v480 = vpop.xlane.xlu0 %479
    %481 = vmax.xlane.f32.xlu0 %v450
    %v482 = vpop.xlane.xlu0 %481
    %v483 = vsub.f32 %v435, %v452
    %v484 = vsub.f32 %v436, %v454
    %v485 = vsub.f32 %v437, %v456
    %v486 = vsub.f32 %v438, %v458
    %v487 = vsub.f32 %v439, %v460
    %v488 = vsub.f32 %v440, %v462
    %v489 = vsub.f32 %v441, %v464
    %v490 = vsub.f32 %v442, %v466
    %v491 = vsub.f32 %v443, %v468
    %v492 = vsub.f32 %v444, %v470
    %v493 = vsub.f32 %v445, %v472
    %v494 = vsub.f32 %v446, %v474
    %v495 = vsub.f32 %v447, %v476
    %v496 = vsub.f32 %v448, %v478
    %v497 = vsub.f32 %v449, %v480
    %v498 = vsub.f32 %v450, %v482
    %v499 = vmul.f32 %v483, 1.442695
    %v500 = vpow.pop %v499
    %v501 = vmul.f32 %v484, 1.442695
    %v502 = vpow.pop %v501
    %v503 = vmul.f32 %v485, 1.442695
    %v504 = vpow.pop %v503
    %v505 = vmul.f32 %v486, 1.442695
    %v506 = vpow.pop %v505
    %v507 = vmul.f32 %v487, 1.442695
    %v508 = vpow.pop %v507
    %v509 = vmul.f32 %v488, 1.442695
    %v510 = vpow.pop %v509
    %v511 = vmul.f32 %v489, 1.442695
    %v512 = vpow.pop %v511
    %v513 = vmul.f32 %v490, 1.442695
    %v514 = vpow.pop %v513
    %v515 = vmul.f32 %v491, 1.442695
    %v516 = vpow.pop %v515
    %v517 = vmul.f32 %v492, 1.442695
    %v518 = vpow.pop %v517
    %v519 = vmul.f32 %v493, 1.442695
    %v520 = vpow.pop %v519
    %v521 = vmul.f32 %v494, 1.442695
    %v522 = vpow.pop %v521
    %v523 = vmul.f32 %v495, 1.442695
    %v524 = vpow.pop %v523
    %v525 = vmul.f32 %v496, 1.442695
    %v526 = vpow.pop %v525
    %v527 = vmul.f32 %v497, 1.442695
    %v528 = vpow.pop %v527
    %v529 = vmul.f32 %v498, 1.442695
    %v530 = vpow.pop %v529
    %531 = vadd.xlane.f32.xlu0 %v500
    %v532 = vpop.xlane.xlu0 %531
    %533 = vadd.xlane.f32.xlu0 %v502
    %v534 = vpop.xlane.xlu0 %533
    %535 = vadd.xlane.f32.xlu0 %v504
    %v536 = vpop.xlane.xlu0 %535
    %537 = vadd.xlane.f32.xlu0 %v506
    %v538 = vpop.xlane.xlu0 %537
    %539 = vadd.xlane.f32.xlu0 %v508
    %v540 = vpop.xlane.xlu0 %539
    %541 = vadd.xlane.f32.xlu0 %v510
    %v542 = vpop.xlane.xlu0 %541
    %543 = vadd.xlane.f32.xlu0 %v512
    %v544 = vpop.xlane.xlu0 %543
    %545 = vadd.xlane.f32.xlu0 %v514
    %v546 = vpop.xlane.xlu0 %545
    %547 = vadd.xlane.f32.xlu0 %v516
    %v548 = vpop.xlane.xlu0 %547
    %549 = vadd.xlane.f32.xlu0 %v518
    %v550 = vpop.xlane.xlu0 %549
    %551 = vadd.xlane.f32.xlu0 %v520
    %v552 = vpop.xlane.xlu0 %551
    %553 = vadd.xlane.f32.xlu0 %v522
    %v554 = vpop.xlane.xlu0 %553
    %555 = vadd.xlane.f32.xlu0 %v524
    %v556 = vpop.xlane.xlu0 %555
    %557 = vadd.xlane.f32.xlu0 %v526
    %v558 = vpop.xlane.xlu0 %557
    %559 = vadd.xlane.f32.xlu0 %v528
    %v560 = vpop.xlane.xlu0 %559
    %561 = vadd.xlane.f32.xlu0 %v530
    %v562 = vpop.xlane.xlu0 %561
    %v563 = vrcp.pop %v532
    %v564 = vrcp.pop %v534
    %v565 = vrcp.pop %v536
    %v566 = vrcp.pop %v538
    %v567 = vrcp.pop %v540
    %v568 = vrcp.pop %v542
    %v569 = vrcp.pop %v544
    %v570 = vrcp.pop %v546
    %v571 = vrcp.pop %v548
    %v572 = vrcp.pop %v550
    %v573 = vrcp.pop %v552
    %v574 = vrcp.pop %v554
    %v575 = vrcp.pop %v556
    %v576 = vrcp.pop %v558
    %v577 = vrcp.pop %v560
    %v578 = vrcp.pop %v562
    %v579 = vmul.f32 %v500, %v563
    %v580 = vmul.f32 %v502, %v564
    %v581 = vmul.f32 %v504, %v565
    %v582 = vmul.f32 %v506, %v566
    %v583 = vmul.f32 %v508, %v567
    %v584 = vmul.f32 %v510, %v568
    %v585 = vmul.f32 %v512, %v569
    %v586 = vmul.f32 %v514, %v570
    %v587 = vmul.f32 %v516, %v571
    %v588 = vmul.f32 %v518, %v572
    %v589 = vmul.f32 %v520, %v573
    %v590 = vmul.f32 %v522, %v574
    %v591 = vmul.f32 %v524, %v575
    %v592 = vmul.f32 %v526, %v576
    %v593 = vmul.f32 %v528, %v577
    %v594 = vmul.f32 %v530, %v578
    %595 = vst [vmem:[#allocation10] sm:$0xff] %v579
    %596 = vst [vmem:[#allocation10 + $0x8] sm:$0xff] %v580
    %597 = vst [vmem:[#allocation10 + $0x10] sm:$0xff] %v581
    %598 = vst [vmem:[#allocation10 + $0x18] sm:$0xff] %v582
    %599 = vst [vmem:[#allocation10 + $0x20] sm:$0xff] %v583
    %600 = vst [vmem:[#allocation10 + $0x28] sm:$0xff] %v584
    %601 = vst [vmem:[#allocation10 + $0x30] sm:$0xff] %v585
    %602 = vst [vmem:[#allocation10 + $0x38] sm:$0xff] %v586
    %603 = vst [vmem:[#allocation10 + $0x40] sm:$0xff] %v587
    %604 = vst [vmem:[#allocation10 + $0x48] sm:$0xff] %v588
    %605 = vst [vmem:[#allocation10 + $0x50] sm:$0xff] %v589
    %606 = vst [vmem:[#allocation10 + $0x58] sm:$0xff] %v590
    %607 = vst [vmem:[#allocation10 + $0x60] sm:$0xff] %v591
    %608 = vst [vmem:[#allocation10 + $0x68] sm:$0xff] %v592
    %609 = vst [vmem:[#allocation10 + $0x70] sm:$0xff] %v593
    %610 = vst [vmem:[#allocation10 + $0x78] sm:$0xff] %v594
    %v611 = vld [vmem:[#allocation7] sm:$0xff]
    %v612 = vld [vmem:[#allocation7 + $0x8] sm:$0xff]
    %v613 = vld [vmem:[#allocation7 + $0x10] sm:$0xff]
    %v614 = vld [vmem:[#allocation7 + $0x18] sm:$0xff]
    %v615 = vld [vmem:[#allocation7 + $0x20] sm:$0xff]
    %v616 = vld [vmem:[#allocation7 + $0x28] sm:$0xff]
    %v617 = vld [vmem:[#allocation7 + $0x30] sm:$0xff]
    %v618 = vld [vmem:[#allocation7 + $0x38] sm:$0xff]
    %v619 = vld [vmem:[#allocation7 + $0x40] sm:$0xff]
    %v620 = vld [vmem:[#allocation7 + $0x48] sm:$0xff]
    %v621 = vld [vmem:[#allocation7 + $0x50] sm:$0xff]
    %v622 = vld [vmem:[#allocation7 + $0x58] sm:$0xff]
    %v623 = vld [vmem:[#allocation7 + $0x60] sm:$0xff]
    %v624 = vld [vmem:[#allocation7 + $0x68] sm:$0xff]
    %v625 = vld [vmem:[#allocation7 + $0x70] sm:$0xff]
    %v626 = vld [vmem:[#allocation7 + $0x78] sm:$0xff]
    %v627 = vld [vmem:[%s4] sm:$0x1]
    %v629 = vlaneseq
    %v630 = vshrl.u32 %v629, 7
    %v631 = vsub.s32 0, %v630
    %v632 = vrot.slane %v627, %v631
    %634 = vmatprep.subr.mxu0 0.0
    %635 = vmatpush1.msra.mxu0 %v611
    %636 = vmatprep.subr.mxu0 0.0
    %637 = vmatpush1.msra.mxu0 %v612
    %638 = vmatprep.subr.mxu0 0.0
    %639 = vmatpush1.msra.mxu0 %v613
    %640 = vmatprep.subr.mxu0 0.0
    %641 = vmatpush1.msra.mxu0 %v614
    %642 = vmatprep.subr.mxu0 0.0
    %643 = vmatpush1.msra.mxu0 %v615
    %644 = vmatprep.subr.mxu0 0.0
    %645 = vmatpush1.msra.mxu0 %v616
    %646 = vmatprep.subr.mxu0 0.0
    %647 = vmatpush1.msra.mxu0 %v617
    %648 = vmatprep.subr.mxu0 0.0
    %649 = vmatpush1.msra.mxu0 %v618
    %650 = vmatprep.subr.mxu0 0.0
    %651 = vmatpush1.msra.mxu0 %v619
    %652 = vmatprep.subr.mxu0 0.0
    %653 = vmatpush1.msra.mxu0 %v620
    %654 = vmatprep.subr.mxu0 0.0
    %655 = vmatpush1.msra.mxu0 %v621
    %656 = vmatprep.subr.mxu0 0.0
    %657 = vmatpush1.msra.mxu0 %v622
    %658 = vmatprep.subr.mxu0 0.0
    %659 = vmatpush1.msra.mxu0 %v623
    %660 = vmatprep.subr.mxu0 0.0
    %661 = vmatpush1.msra.mxu0 %v624
    %662 = vmatprep.subr.mxu0 0.0
    %663 = vmatpush1.msra.mxu0 %v625
    %664 = vmatprep.subr.mxu0 0.0
    %665 = vmatpush1.msra.mxu0 %v626
    %666 = vmatprep.subr.mxu0 0.0
    %667 = vmatpush1.msra.mxu0 0.0
    %668 = vmatprep.subr.mxu0 0.0
    %669 = vmatpush1.msra.mxu0 0.0
    %670 = vmatprep.subr.mxu0 0.0
    %671 = vmatpush1.msra.mxu0 0.0
    %672 = vmatprep.subr.mxu0 0.0
    %673 = vmatpush1.msra.mxu0 0.0
    %674 = vmatprep.subr.mxu0 0.0
    %675 = vmatpush1.msra.mxu0 0.0
    %676 = vmatprep.subr.mxu0 0.0
    %677 = vmatpush1.msra.mxu0 0.0
    %678 = vmatprep.subr.mxu0 0.0
    %679 = vmatpush1.msra.mxu0 0.0
    %680 = vmatprep.subr.mxu0 0.0
    %681 = vmatpush1.msra.mxu0 0.0
    %682 = vmatprep.subr.mxu0 0.0
    %683 = vmatpush1.msra.mxu0 0.0
    %684 = vmatprep.subr.mxu0 0.0
    %685 = vmatpush1.msra.mxu0 0.0
    %686 = vmatprep.subr.mxu0 0.0
    %687 = vmatpush1.msra.mxu0 0.0
    %688 = vmatprep.subr.mxu0 0.0
    %689 = vmatpush1.msra.mxu0 0.0
    %690 = vmatprep.subr.mxu0 0.0
    %691 = vmatpush1.msra.mxu0 0.0
    %692 = vmatprep.subr.mxu0 0.0
    %693 = vmatpush1.msra.mxu0 0.0
    %694 = vmatprep.subr.mxu0 0.0
    %695 = vmatpush1.msra.mxu0 0.0
    %696 = vmatprep.subr.mxu0 0.0
    %697 = vmatpush1.msra.mxu0 0.0
    %698 = vmatprep.mubr.f32.mxu0 0.0
    %699 = vmatmul.mubr.f32.gmra.mrb[0].mxu0 %v103
    %v700 = vpop.f32.mrb[0].mxu0
    %v701 = vadd.f32 %v632, %v700
    %v702 = vpop.f32.mrb[0].mxu0
    %703 = vmatprep.mubr.f32.mxu0 0.0
    %704 = vmatmul.mubr.f32.gmra.mrb[0].mxu0 %v104
    %v705 = vpop.f32.mrb[0].mxu0
    %v706 = vadd.f32 %v632, %v705
    %v707 = vpop.f32.mrb[0].mxu0
    %708 = vmatprep.mubr.f32.mxu0 0.0
    %709 = vmatmul.mubr.f32.gmra.mrb[0].mxu0 %v105
    %v710 = vpop.f32.mrb[0].mxu0
    %v711 = vadd.f32 %v632, %v710
    %v712 = vpop.f32.mrb[0].mxu0
    %713 = vmatprep.mubr.f32.mxu0 0.0
    %714 = vmatmul.mubr.f32.gmra.mrb[0].mxu0 %v106
    %v715 = vpop.f32.mrb[0].mxu0
    %v716 = vadd.f32 %v632, %v715
    %v717 = vpop.f32.mrb[0].mxu0
    %718 = vmatprep.mubr.f32.mxu0 0.0
    %719 = vmatmul.mubr.f32.gmra.mrb[0].mxu0 %v107
    %v720 = vpop.f32.mrb[0].mxu0
    %v721 = vadd.f32 %v632, %v720
    %v722 = vpop.f32.mrb[0].mxu0
    %723 = vmatprep.mubr.f32.mxu0 0.0
    %724 = vmatmul.mubr.f32.gmra.mrb[0].mxu0 %v108
    %v725 = vpop.f32.mrb[0].mxu0
    %v726 = vadd.f32 %v632, %v725
    %v727 = vpop.f32.mrb[0].mxu0
    %728 = vmatprep.mubr.f32.mxu0 0.0
    %729 = vmatmul.mubr.f32.gmra.mrb[0].mxu0 %v109
    %v730 = vpop.f32.mrb[0].mxu0
    %v731 = vadd.f32 %v632, %v730
    %v732 = vpop.f32.mrb[0].mxu0
    %733 = vmatprep.mubr.f32.mxu0 0.0
    %734 = vmatmul.mubr.f32.gmra.mrb[0].mxu0 %v110
    %v735 = vpop.f32.mrb[0].mxu0
    %v736 = vadd.f32 %v632, %v735
    %v737 = vpop.f32.mrb[0].mxu0
    %738 = vmatprep.mubr.f32.mxu0 0.0
    %739 = vmatmul.mubr.f32.gmra.mrb[0].mxu0 %v111
    %v740 = vpop.f32.mrb[0].mxu0
    %v741 = vadd.f32 %v632, %v740
    %v742 = vpop.f32.mrb[0].mxu0
    %743 = vmatprep.mubr.f32.mxu0 0.0
    %744 = vmatmul.mubr.f32.gmra.mrb[0].mxu0 %v112
    %v745 = vpop.f32.mrb[0].mxu0
    %v746 = vadd.f32 %v632, %v745
    %v747 = vpop.f32.mrb[0].mxu0
    %748 = vmatprep.mubr.f32.mxu0 0.0
    %749 = vmatmul.mubr.f32.gmra.mrb[0].mxu0 %v113
    %v750 = vpop.f32.mrb[0].mxu0
    %v751 = vadd.f32 %v632, %v750
    %v752 = vpop.f32.mrb[0].mxu0
    %753 = vmatprep.mubr.f32.mxu0 0.0
    %754 = vmatmul.mubr.f32.gmra.mrb[0].mxu0 %v114
    %v755 = vpop.f32.mrb[0].mxu0
    %v756 = vadd.f32 %v632, %v755
    %v757 = vpop.f32.mrb[0].mxu0
    %758 = vmatprep.mubr.f32.mxu0 0.0
    %759 = vmatmul.mubr.f32.gmra.mrb[0].mxu0 %v115
    %v760 = vpop.f32.mrb[0].mxu0
    %v761 = vadd.f32 %v632, %v760
    %v762 = vpop.f32.mrb[0].mxu0
    %763 = vmatprep.mubr.f32.mxu0 0.0
    %764 = vmatmul.mubr.f32.gmra.mrb[0].mxu0 %v116
    %v765 = vpop.f32.mrb[0].mxu0
    %v766 = vadd.f32 %v632, %v765
    %v767 = vpop.f32.mrb[0].mxu0
    %768 = vmatprep.mubr.f32.mxu0 0.0
    %769 = vmatmul.mubr.f32.gmra.mrb[0].mxu0 %v117
    %v770 = vpop.f32.mrb[0].mxu0
    %v771 = vadd.f32 %v632, %v770
    %v772 = vpop.f32.mrb[0].mxu0
    %773 = vmatprep.mubr.f32.mxu0 0.0
    %774 = vmatmul.mubr.f32.gmra.mrb[0].mxu0 %v118
    %v775 = vpop.f32.mrb[0].mxu0
    %v776 = vadd.f32 %v632, %v775
    %v777 = vpop.f32.mrb[0].mxu0
    %778 = vdwg.mxu0
    %vm779 = vcmp.gt.f32.partialorder %v701, 0.0
    %vm780 = vcmp.gt.f32.partialorder %v706, 0.0
    %vm781 = vcmp.gt.f32.partialorder %v711, 0.0
    %vm782 = vcmp.gt.f32.partialorder %v716, 0.0
    %vm783 = vcmp.gt.f32.partialorder %v721, 0.0
    %vm784 = vcmp.gt.f32.partialorder %v726, 0.0
    %vm785 = vcmp.gt.f32.partialorder %v731, 0.0
    %vm786 = vcmp.gt.f32.partialorder %v736, 0.0
    %vm787 = vcmp.gt.f32.partialorder %v741, 0.0
    %vm788 = vcmp.gt.f32.partialorder %v746, 0.0
    %vm789 = vcmp.gt.f32.partialorder %v751, 0.0
    %vm790 = vcmp.gt.f32.partialorder %v756, 0.0
    %vm791 = vcmp.gt.f32.partialorder %v761, 0.0
    %vm792 = vcmp.gt.f32.partialorder %v766, 0.0
    %vm793 = vcmp.gt.f32.partialorder %v771, 0.0
    %vm794 = vcmp.gt.f32.partialorder %v776, 0.0
    %v795 = vmul.f32 %v701, 0.1
    %v796 = vmul.f32 %v706, 0.1
    %v797 = vmul.f32 %v711, 0.1
    %v798 = vmul.f32 %v716, 0.1
    %v799 = vmul.f32 %v721, 0.1
    %v800 = vmul.f32 %v726, 0.1
    %v801 = vmul.f32 %v731, 0.1
    %v802 = vmul.f32 %v736, 0.1
    %v803 = vmul.f32 %v741, 0.1
    %v804 = vmul.f32 %v746, 0.1
    %v805 = vmul.f32 %v751, 0.1
    %v806 = vmul.f32 %v756, 0.1
    %v807 = vmul.f32 %v761, 0.1
    %v808 = vmul.f32 %v766, 0.1
    %v809 = vmul.f32 %v771, 0.1
    %v810 = vmul.f32 %v776, 0.1
    %v811 = vsel %vm779, %v701, %v795
    %v812 = vsel %vm780, %v706, %v796
    %v813 = vsel %vm781, %v711, %v797
    %v814 = vsel %vm782, %v716, %v798
    %v815 = vsel %vm783, %v721, %v799
    %v816 = vsel %vm784, %v726, %v800
    %v817 = vsel %vm785, %v731, %v801
    %v818 = vsel %vm786, %v736, %v802
    %v819 = vsel %vm787, %v741, %v803
    %v820 = vsel %vm788, %v746, %v804
    %v821 = vsel %vm789, %v751, %v805
    %v822 = vsel %vm790, %v756, %v806
    %v823 = vsel %vm791, %v761, %v807
    %v824 = vsel %vm792, %v766, %v808
    %v825 = vsel %vm793, %v771, %v809
    %v826 = vsel %vm794, %v776, %v810
    %v827 = vld [vmem:[#allocation8] sm:$0xff]
    %v828 = vld [vmem:[#allocation8 + $0x8] sm:$0xff]
    %v829 = vld [vmem:[#allocation8 + $0x10] sm:$0xff]
    %v830 = vld [vmem:[#allocation8 + $0x18] sm:$0xff]
    %v831 = vld [vmem:[#allocation8 + $0x20] sm:$0xff]
    %v832 = vld [vmem:[#allocation8 + $0x28] sm:$0xff]
    %v833 = vld [vmem:[#allocation8 + $0x30] sm:$0xff]
    %v834 = vld [vmem:[#allocation8 + $0x38] sm:$0xff]
    %v835 = vld [vmem:[#allocation8 + $0x40] sm:$0xff]
    %v836 = vld [vmem:[#allocation8 + $0x48] sm:$0xff]
    %v837 = vld [vmem:[#allocation8 + $0x50] sm:$0xff]
    %v838 = vld [vmem:[#allocation8 + $0x58] sm:$0xff]
    %v839 = vld [vmem:[#allocation8 + $0x60] sm:$0xff]
    %v840 = vld [vmem:[#allocation8 + $0x68] sm:$0xff]
    %v841 = vld [vmem:[#allocation8 + $0x70] sm:$0xff]
    %v842 = vld [vmem:[#allocation8 + $0x78] sm:$0xff]
    %v843 = vld [vmem:[%s6] sm:$0x1]
    %v845 = vlaneseq
    %v846 = vshrl.u32 %v845, 7
    %v847 = vsub.s32 0, %v846
    %v848 = vrot.slane %v843, %v847
    %850 = vmatprep.subr.mxu0 0.0
    %851 = vmatpush1.msra.mxu0 %v827
    %852 = vmatprep.subr.mxu0 0.0
    %853 = vmatpush1.msra.mxu0 %v828
    %854 = vmatprep.subr.mxu0 0.0
    %855 = vmatpush1.msra.mxu0 %v829
    %856 = vmatprep.subr.mxu0 0.0
    %857 = vmatpush1.msra.mxu0 %v830
    %858 = vmatprep.subr.mxu0 0.0
    %859 = vmatpush1.msra.mxu0 %v831
    %860 = vmatprep.subr.mxu0 0.0
    %861 = vmatpush1.msra.mxu0 %v832
    %862 = vmatprep.subr.mxu0 0.0
    %863 = vmatpush1.msra.mxu0 %v833
    %864 = vmatprep.subr.mxu0 0.0
    %865 = vmatpush1.msra.mxu0 %v834
    %866 = vmatprep.subr.mxu0 0.0
    %867 = vmatpush1.msra.mxu0 %v835
    %868 = vmatprep.subr.mxu0 0.0
    %869 = vmatpush1.msra.mxu0 %v836
    %870 = vmatprep.subr.mxu0 0.0
    %871 = vmatpush1.msra.mxu0 %v837
    %872 = vmatprep.subr.mxu0 0.0
    %873 = vmatpush1.msra.mxu0 %v838
    %874 = vmatprep.subr.mxu0 0.0
    %875 = vmatpush1.msra.mxu0 %v839
    %876 = vmatprep.subr.mxu0 0.0
    %877 = vmatpush1.msra.mxu0 %v840
    %878 = vmatprep.subr.mxu0 0.0
    %879 = vmatpush1.msra.mxu0 %v841
    %880 = vmatprep.subr.mxu0 0.0
    %881 = vmatpush1.msra.mxu0 %v842
    %882 = vmatprep.subr.mxu0 0.0
    %883 = vmatpush1.msra.mxu0 0.0
    %884 = vmatprep.subr.mxu0 0.0
    %885 = vmatpush1.msra.mxu0 0.0
    %886 = vmatprep.subr.mxu0 0.0
    %887 = vmatpush1.msra.mxu0 0.0
    %888 = vmatprep.subr.mxu0 0.0
    %889 = vmatpush1.msra.mxu0 0.0
    %890 = vmatprep.subr.mxu0 0.0
    %891 = vmatpush1.msra.mxu0 0.0
    %892 = vmatprep.subr.mxu0 0.0
    %893 = vmatpush1.msra.mxu0 0.0
    %894 = vmatprep.subr.mxu0 0.0
    %895 = vmatpush1.msra.mxu0 0.0
    %896 = vmatprep.subr.mxu0 0.0
    %897 = vmatpush1.msra.mxu0 0.0
    %898 = vmatprep.subr.mxu0 0.0
    %899 = vmatpush1.msra.mxu0 0.0
    %900 = vmatprep.subr.mxu0 0.0
    %901 = vmatpush1.msra.mxu0 0.0
    %902 = vmatprep.subr.mxu0 0.0
    %903 = vmatpush1.msra.mxu0 0.0
    %904 = vmatprep.subr.mxu0 0.0
    %905 = vmatpush1.msra.mxu0 0.0
    %906 = vmatprep.subr.mxu0 0.0
    %907 = vmatpush1.msra.mxu0 0.0
    %908 = vmatprep.subr.mxu0 0.0
    %909 = vmatpush1.msra.mxu0 0.0
    %910 = vmatprep.subr.mxu0 0.0
    %911 = vmatpush1.msra.mxu0 0.0
    %912 = vmatprep.subr.mxu0 0.0
    %913 = vmatpush1.msra.mxu0 0.0
    %914 = vmatprep.mubr.f32.mxu0 0.0
    %915 = vmatmul.mubr.f32.gmra.mrb[0].mxu0 %v811
    %v916 = vpop.f32.mrb[0].mxu0
    %v917 = vadd.f32 %v848, %v916
    %v918 = vpop.f32.mrb[0].mxu0
    %919 = vmatprep.mubr.f32.mxu0 0.0
    %920 = vmatmul.mubr.f32.gmra.mrb[0].mxu0 %v812
    %v921 = vpop.f32.mrb[0].mxu0
    %v922 = vadd.f32 %v848, %v921
    %v923 = vpop.f32.mrb[0].mxu0
    %924 = vmatprep.mubr.f32.mxu0 0.0
    %925 = vmatmul.mubr.f32.gmra.mrb[0].mxu0 %v813
    %v926 = vpop.f32.mrb[0].mxu0
    %v927 = vadd.f32 %v848, %v926
    %v928 = vpop.f32.mrb[0].mxu0
    %929 = vmatprep.mubr.f32.mxu0 0.0
    %930 = vmatmul.mubr.f32.gmra.mrb[0].mxu0 %v814
    %v931 = vpop.f32.mrb[0].mxu0
    %v932 = vadd.f32 %v848, %v931
    %v933 = vpop.f32.mrb[0].mxu0
    %934 = vmatprep.mubr.f32.mxu0 0.0
    %935 = vmatmul.mubr.f32.gmra.mrb[0].mxu0 %v815
    %v936 = vpop.f32.mrb[0].mxu0
    %v937 = vadd.f32 %v848, %v936
    %v938 = vpop.f32.mrb[0].mxu0
    %939 = vmatprep.mubr.f32.mxu0 0.0
    %940 = vmatmul.mubr.f32.gmra.mrb[0].mxu0 %v816
    %v941 = vpop.f32.mrb[0].mxu0
    %v942 = vadd.f32 %v848, %v941
    %v943 = vpop.f32.mrb[0].mxu0
    %944 = vmatprep.mubr.f32.mxu0 0.0
    %945 = vmatmul.mubr.f32.gmra.mrb[0].mxu0 %v817
    %v946 = vpop.f32.mrb[0].mxu0
    %v947 = vadd.f32 %v848, %v946
    %v948 = vpop.f32.mrb[0].mxu0
    %949 = vmatprep.mubr.f32.mxu0 0.0
    %950 = vmatmul.mubr.f32.gmra.mrb[0].mxu0 %v818
    %v951 = vpop.f32.mrb[0].mxu0
    %v952 = vadd.f32 %v848, %v951
    %v953 = vpop.f32.mrb[0].mxu0
    %954 = vmatprep.mubr.f32.mxu0 0.0
    %955 = vmatmul.mubr.f32.gmra.mrb[0].mxu0 %v819
    %v956 = vpop.f32.mrb[0].mxu0
    %v957 = vadd.f32 %v848, %v956
    %v958 = vpop.f32.mrb[0].mxu0
    %959 = vmatprep.mubr.f32.mxu0 0.0
    %960 = vmatmul.mubr.f32.gmra.mrb[0].mxu0 %v820
    %v961 = vpop.f32.mrb[0].mxu0
    %v962 = vadd.f32 %v848, %v961
    %v963 = vpop.f32.mrb[0].mxu0
    %964 = vmatprep.mubr.f32.mxu0 0.0
    %965 = vmatmul.mubr.f32.gmra.mrb[0].mxu0 %v821
    %v966 = vpop.f32.mrb[0].mxu0
    %v967 = vadd.f32 %v848, %v966
    %v968 = vpop.f32.mrb[0].mxu0
    %969 = vmatprep.mubr.f32.mxu0 0.0
    %970 = vmatmul.mubr.f32.gmra.mrb[0].mxu0 %v822
    %v971 = vpop.f32.mrb[0].mxu0
    %v972 = vadd.f32 %v848, %v971
    %v973 = vpop.f32.mrb[0].mxu0
    %974 = vmatprep.mubr.f32.mxu0 0.0
    %975 = vmatmul.mubr.f32.gmra.mrb[0].mxu0 %v823
    %v976 = vpop.f32.mrb[0].mxu0
    %v977 = vadd.f32 %v848, %v976
    %v978 = vpop.f32.mrb[0].mxu0
    %979 = vmatprep.mubr.f32.mxu0 0.0
    %980 = vmatmul.mubr.f32.gmra.mrb[0].mxu0 %v824
    %v981 = vpop.f32.mrb[0].mxu0
    %v982 = vadd.f32 %v848, %v981
    %v983 = vpop.f32.mrb[0].mxu0
    %984 = vmatprep.mubr.f32.mxu0 0.0
    %985 = vmatmul.mubr.f32.gmra.mrb[0].mxu0 %v825
    %v986 = vpop.f32.mrb[0].mxu0
    %v987 = vadd.f32 %v848, %v986
    %v988 = vpop.f32.mrb[0].mxu0
    %989 = vmatprep.mubr.f32.mxu0 0.0
    %990 = vmatmul.mubr.f32.gmra.mrb[0].mxu0 %v826
    %v991 = vpop.f32.mrb[0].mxu0
    %v992 = vadd.f32 %v848, %v991
    %v993 = vpop.f32.mrb[0].mxu0
    %994 = vdwg.mxu0
    %995 = vst [vmem:[#allocation11] sm:$0xff] %v917
    %996 = vst [vmem:[#allocation11 + $0x8] sm:$0xff] %v922
    %997 = vst [vmem:[#allocation11 + $0x10] sm:$0xff] %v927
    %998 = vst [vmem:[#allocation11 + $0x18] sm:$0xff] %v932
    %999 = vst [vmem:[#allocation11 + $0x20] sm:$0xff] %v937
    %1000 = vst [vmem:[#allocation11 + $0x28] sm:$0xff] %v942
    %1001 = vst [vmem:[#allocation11 + $0x30] sm:$0xff] %v947
    %1002 = vst [vmem:[#allocation11 + $0x38] sm:$0xff] %v952
    %1003 = vst [vmem:[#allocation11 + $0x40] sm:$0xff] %v957
    %1004 = vst [vmem:[#allocation11 + $0x48] sm:$0xff] %v962
    %1005 = vst [vmem:[#allocation11 + $0x50] sm:$0xff] %v967
    %1006 = vst [vmem:[#allocation11 + $0x58] sm:$0xff] %v972
    %1007 = vst [vmem:[#allocation11 + $0x60] sm:$0xff] %v977
    %1008 = vst [vmem:[#allocation11 + $0x68] sm:$0xff] %v982
    %1009 = vst [vmem:[#allocation11 + $0x70] sm:$0xff] %v987
    %1010 = vst [vmem:[#allocation11 + $0x78] sm:$0xff] %v992
    // Predicated region
    $region46: #{tpu_custom_call.1} parent=1 // pred_check
      _
    $region47: #{tpu_custom_call.1} parent=1 // pred_check_branch
      %1012 = sbr.rel (0) target = $region49
    $region48: #{tpu_custom_call.1} parent=1 // pred_region
      %s1014 = ssub.s32 2048, 2048
      %1015 = vsyncadd [#allocation4], %s1014
      %s1016 = sshll.u32 [#allocation10], 4
      %s1017 = int_to_ptr.vmem [resolvable:$true] %s1016
      %1022 = dma.vmem_to_hbm [thread:$0]  %s1017, 2048, %s7, [#allocation4], 128, 128, 8
    $region49: #{tpu_custom_call.1} parent=1 // pred_fallthru
      _
    // Predicated region
    $region50: #{tpu_custom_call.1} parent=1 // pred_check
      _
    $region51: #{tpu_custom_call.1} parent=1 // pred_check_branch
      %1024 = sbr.rel (0) target = $region53
    $region52: #{tpu_custom_call.1} parent=1 // pred_region
      %s1026 = ssub.s32 2048, 2048
      %1027 = vsyncadd [#allocation12], %s1026
      %s1028 = sshll.u32 [#allocation11], 4
      %s1029 = int_to_ptr.vmem [resolvable:$true] %s1028
      %1034 = dma.vmem_to_hbm [thread:$0]  %s1029, 2048, %s8, [#allocation12], 128, 128, 8
    $region53: #{tpu_custom_call.1} parent=1 // pred_fallthru
      _
    // Predicated region
    $region54: #{tpu_custom_call.1} parent=1 // pred_check
      _
    $region55: #{tpu_custom_call.1} parent=1 // pred_check_branch
      %1036 = sbr.rel (0) target = $region57
    $region56: #{tpu_custom_call.1} parent=1 // pred_region
      %1037 = dma.done [#allocation4], 2048
    $region57: #{tpu_custom_call.1} parent=1 // pred_fallthru
      _
    // Predicated region
    $region58: #{tpu_custom_call.1} parent=1 // pred_check
      _
    $region59: #{tpu_custom_call.1} parent=1 // pred_check_branch
      %1039 = sbr.rel (0) target = $region61
    $region60: #{tpu_custom_call.1} parent=1 // pred_region
      %1040 = dma.done [#allocation12], 2048
    $region61: #{tpu_custom_call.1} parent=1 // pred_fallthru
      _
    %1041 = vsyncpa [#allocation3], 1
    %1042 = vsyncpa [#allocation6], 1
    %1043 = vsyncpa [#allocation9], 1
    %1044 = vsyncpa [#allocation4], 1
    %1045 = vsyncpa [#allocation12], 1

</llo_original>
